<compile_context>
chip_gen: v7x
topology: tpu7x:2x2x1
jax: 0.10.0
libtpu: 0.0.40
codegen_flags: <defaults>
</compile_context>

<pallas_src>
import functools

import jax
import jax.numpy as jnp
from jax.experimental import pallas as pl
from jax.experimental.pallas import tpu as pltpu

_LANE = 128
_SUBLANE = 8
# Batches at or above this get >= 2 grid steps so both v7x TensorCores are fed.
_MIN_ROWS_FOR_TC_SPLIT = 4096


def _round_up(n, m):
    return ((n + m - 1) // m) * m


def _cdiv(a, b):
    return (a + b - 1) // b


def mlp_kernel(x_ref, w1_ref, b1_ref, w2_ref, b2_ref, w3_ref, b3_ref, o_ref):
    # x arrives as f32; cast to bf16 in-VMEM (cheap VPU work) so HBM only ever
    # sees the original f32 x (no wrapper-side convert pass).
    x = x_ref[...].astype(jnp.bfloat16)

    # Layer 1: Linear + ReLU   (dropout p=0 -> identity)
    h1 = jnp.dot(x, w1_ref[...], preferred_element_type=jnp.float32)
    h1 = jnp.maximum(h1 + b1_ref[...], 0.0)

    # Layer 2: Linear + ReLU
    h2 = jnp.dot(h1.astype(jnp.bfloat16), w2_ref[...],
                 preferred_element_type=jnp.float32)
    h2 = jnp.maximum(h2 + b2_ref[...], 0.0)

    # Output layer: Linear (no activation)
    out = jnp.dot(h2.astype(jnp.bfloat16), w3_ref[...],
                  preferred_element_type=jnp.float32)
    o_ref[...] = (out + b3_ref[...]).astype(o_ref.dtype)


@functools.partial(jax.jit, static_argnames=("tile_batch",))
def approximator_forward(x, params, *, tile_batch=8192):
    """Fused MLP forward pass as a single batch-tiled Pallas kernel.

    Args:
      x: (batch, input_dim) float32.
      params: dict with w1 (in,h1), b1 (1,h1), w2 (h1,h2), b2 (1,h2),
              w3 (h2,out), b3 (1,out), all float32.
      tile_batch: max rows per grid step.

    Returns:
      (batch, output_dim) float32.
    """
    batch, in_dim = x.shape
    h1_dim = params["w1"].shape[1]
    h2_dim = params["w2"].shape[1]
    out_dim = params["w3"].shape[1]

    # bf16 weights (native MXU dtype, tiny & VMEM-resident); biases stay f32.
    w1 = params["w1"].astype(jnp.bfloat16)
    w2 = params["w2"].astype(jnp.bfloat16)
    w3 = params["w3"].astype(jnp.bfloat16)
    b1 = params["b1"].astype(jnp.float32)
    b2 = params["b2"].astype(jnp.float32)
    b3 = params["b3"].astype(jnp.float32)

    # Zero-pad hidden dims to lane width (exact no-op through Linear+ReLU:
    # padded activations are ReLU(0 + 0) = 0 and padded weight rows are 0).
    h1_p = _round_up(h1_dim, _LANE)
    h2_p = _round_up(h2_dim, _LANE)
    w1 = jnp.pad(w1, ((0, 0), (0, h1_p - h1_dim)))
    b1 = jnp.pad(b1, ((0, 0), (0, h1_p - h1_dim)))
    w2 = jnp.pad(w2, ((0, h1_p - h1_dim), (0, h2_p - h2_dim)))
    b2 = jnp.pad(b2, ((0, 0), (0, h2_p - h2_dim)))
    w3 = jnp.pad(w3, ((0, h2_p - h2_dim), (0, 0)))
    # Do NOT pad in_dim / out_dim: that would inflate HBM traffic on x / output.

    # Tile selection: derive the tile from the batch so residual zero-padding
    # is < 8 rows per grid step; keep >= 2 steps for large batches so both v7x
    # TensorCores get work (no-op on v5e/v6e, which have a single TC).
    n_steps = max(1, _cdiv(batch, tile_batch))
    if batch >= _MIN_ROWS_FOR_TC_SPLIT:
        n_steps = max(n_steps, 2)
    tb = _round_up(_cdiv(batch, n_steps), _SUBLANE)
    padded = n_steps * tb
    if padded != batch:
        x = jnp.pad(x, ((0, padded - batch), (0, 0)))

    # Advisory cost estimate for XLA's scheduler.
    flops = 2 * padded * (in_dim * h1_p + h1_p * h2_p + h2_p * out_dim)
    bytes_accessed = (
        padded * in_dim * 4                                        # x (f32)
        + (in_dim * h1_p + h1_p * h2_p + h2_p * out_dim) * 2       # W (bf16)
        + (h1_p + h2_p + out_dim) * 4                              # biases (f32)
        + padded * out_dim * 4                                     # output (f32)
    )
    cost = pl.CostEstimate(flops=flops, transcendentals=0,
                           bytes_accessed=bytes_accessed)

    out_padded = pl.pallas_call(
        mlp_kernel,
        out_shape=jax.ShapeDtypeStruct((padded, out_dim), jnp.float32),
        grid=(n_steps,),
        in_specs=[
            # Activations: one batch tile per grid step (pipelined, f32).
            pl.BlockSpec((tb, in_dim), lambda i: (i, 0)),
            # Weights / biases: constant block index -> DMA'd once, VMEM-resident.
            pl.BlockSpec(w1.shape, lambda i: (0, 0)),
            pl.BlockSpec(b1.shape, lambda i: (0, 0)),
            pl.BlockSpec(w2.shape, lambda i: (0, 0)),
            pl.BlockSpec(b2.shape, lambda i: (0, 0)),
            pl.BlockSpec(w3.shape, lambda i: (0, 0)),
            pl.BlockSpec(b3.shape, lambda i: (0, 0)),
        ],
        out_specs=pl.BlockSpec((tb, out_dim), lambda i: (i, 0)),
        compiler_params=pltpu.CompilerParams(
            dimension_semantics=("parallel",),
            vmem_limit_bytes=48 * 1024 * 1024,
        ),
        cost_estimate=cost,
    )(x, w1, b1, w2, b2, w3, b3)

    return out_padded[:batch]


def init_params(key, input_dim, output_dim, hidden_units=(32, 32)):
    """Deterministic PyTorch-style (uniform +/- 1/sqrt(fan_in)) init."""
    dims = [input_dim] + list(hidden_units) + [output_dim]
    params = {}
    for i, (fan_in, fan_out) in enumerate(zip(dims[:-1], dims[1:]), start=1):
        key, kw, kb = jax.random.split(key, 3)
        bound = 1.0 / jnp.sqrt(fan_in)
        params[f"w{i}"] = jax.random.uniform(
            kw, (fan_in, fan_out), jnp.float32, -bound, bound)
        params[f"b{i}"] = jax.random.uniform(
            kb, (1, fan_out), jnp.float32, -bound, bound)
    return params


def reference_forward_f32(x, p):
    h1 = jnp.maximum(x @ p["w1"] + p["b1"], 0.0)
    h2 = jnp.maximum(h1 @ p["w2"] + p["b2"], 0.0)
    return h2 @ p["w3"] + p["b3"]


def reference_forward_bf16(x, p):
    """Mirrors the kernel's bf16-inputs / f32-accumulation numerics."""
    xb = x.astype(jnp.bfloat16)
    w1 = p["w1"].astype(jnp.bfloat16)
    w2 = p["w2"].astype(jnp.bfloat16)
    w3 = p["w3"].astype(jnp.bfloat16)
    h1 = jnp.maximum(
        jnp.dot(xb, w1, preferred_element_type=jnp.float32) + p["b1"], 0.0)
    h2 = jnp.maximum(
        jnp.dot(h1.astype(jnp.bfloat16), w2,
                preferred_element_type=jnp.float32) + p["b2"], 0.0)
    return jnp.dot(h2.astype(jnp.bfloat16), w3,
                   preferred_element_type=jnp.float32) + p["b3"]


if __name__ == "__main__":
    input_dim, output_dim = 16, 4
    key = jax.random.PRNGKey(0)
    key, kx_small, kx_big = jax.random.split(key, 3)
    params = init_params(key, input_dim, output_dim, hidden_units=(32, 32))

    # Small-shape check (single grid step, no padding).
    x_small = jax.random.normal(kx_small, (8, input_dim), dtype=jnp.float32)
    out_small = jax.block_until_ready(approximator_forward(x_small, params))
    assert out_small.shape == (8, output_dim)
    assert jnp.allclose(out_small, reference_forward_bf16(x_small, params),
                        atol=1e-4, rtol=1e-4), \
        "mismatch vs bf16-matched reference (small batch)"
    assert jnp.allclose(out_small, reference_forward_f32(x_small, params),
                        atol=5e-2, rtol=5e-2), \
        "mismatch vs f32 reference (small batch)"

    # Ragged batch with the default (large) tile: single step, <=7 pad rows.
    x_big = jax.random.normal(kx_big, (600, input_dim), dtype=jnp.float32)
    out_big = jax.block_until_ready(approximator_forward(x_big, params))
    assert out_big.shape == (600, output_dim)
    assert jnp.allclose(out_big, reference_forward_bf16(x_big, params),
                        atol=1e-4, rtol=1e-4), \
        "mismatch vs bf16-matched reference (ragged batch)"

    # Force multiple grid steps to exercise the pipelined / parallel-grid path.
    out_big_tiled = jax.block_until_ready(
        approximator_forward(x_big, params, tile_batch=256))
    assert out_big_tiled.shape == (600, output_dim)
    assert jnp.allclose(out_big_tiled, reference_forward_bf16(x_big, params),
                        atol=1e-4, rtol=1e-4), \
        "mismatch vs bf16-matched reference (multi-step grid)"

    print("KERNEL_OK")
</pallas_src>

<mosaic_0001>
module attributes {stable_mosaic.version = 11 : i64} {
  func.func @mlp_kernel(%arg0: i32, %arg1: memref<8x16xf32, #tpu.memory_space<vmem>>, %arg2: memref<16x128xbf16, #tpu.memory_space<vmem>>, %arg3: memref<1x128xf32, #tpu.memory_space<vmem>>, %arg4: memref<128x128xbf16, #tpu.memory_space<vmem>>, %arg5: memref<1x128xf32, #tpu.memory_space<vmem>>, %arg6: memref<128x4xbf16, #tpu.memory_space<vmem>>, %arg7: memref<1x4xf32, #tpu.memory_space<vmem>>, %arg8: memref<8x4xf32, #tpu.memory_space<vmem>>) attributes {dimension_semantics = [#tpu.dimension_semantics<parallel>], iteration_bounds = array<i64: 1>, scalar_prefetch = 0 : i64, scratch_operands = 0 : i64, tpu.core_type = #tpu.core_type<tc>, window_params = [{transform_indices = @transform_0, window_bounds = array<i64: 8, 16>}, {pipeline_mode = #tpu.pipeline_mode<synchronous>, transform_indices = @transform_1, window_bounds = array<i64: 16, 128>}, {pipeline_mode = #tpu.pipeline_mode<synchronous>, transform_indices = @transform_2, window_bounds = array<i64: 1, 128>}, {pipeline_mode = #tpu.pipeline_mode<synchronous>, transform_indices = @transform_3, window_bounds = array<i64: 128, 128>}, {pipeline_mode = #tpu.pipeline_mode<synchronous>, transform_indices = @transform_4, window_bounds = array<i64: 1, 128>}, {pipeline_mode = #tpu.pipeline_mode<synchronous>, transform_indices = @transform_5, window_bounds = array<i64: 128, 4>}, {pipeline_mode = #tpu.pipeline_mode<synchronous>, transform_indices = @transform_6, window_bounds = array<i64: 1, 4>}, {transform_indices = @transform_7, window_bounds = array<i64: 8, 4>}]} {
    %c0 = arith.constant 0 : index
    %c0_0 = arith.constant 0 : index
    %0 = vector.load %arg1[%c0, %c0_0] : memref<8x16xf32, #tpu.memory_space<vmem>>, vector<8x16xf32>
    %1 = arith.truncf %0 : vector<8x16xf32> to vector<8x16xbf16>
    %c0_1 = arith.constant 0 : index
    %c0_2 = arith.constant 0 : index
    %2 = vector.load %arg2[%c0_1, %c0_2] : memref<16x128xbf16, #tpu.memory_space<vmem>>, vector<16x128xbf16>
    %cst = arith.constant dense<0.000000e+00> : vector<8x128xf32>
    %3 = tpu.matmul %1, %2, %cst {dimension_numbers = #tpu.dot_dimension_numbers<[1], [0], [0], [1], [0, 0, 1, 1], [], []>} : vector<8x16xbf16>, vector<16x128xbf16>, vector<8x128xf32> -> vector<8x128xf32>
    %c0_3 = arith.constant 0 : index
    %c0_4 = arith.constant 0 : index
    %4 = vector.load %arg3[%c0_3, %c0_4] : memref<1x128xf32, #tpu.memory_space<vmem>>, vector<1x128xf32>
    %5 = vector.broadcast %4 : vector<1x128xf32> to vector<8x128xf32>
    %6 = arith.addf %3, %5 : vector<8x128xf32>
    %cst_5 = arith.constant 0.000000e+00 : f32
    %7 = vector.broadcast %cst_5 : f32 to vector<8x128xf32>
    %8 = arith.maximumf %6, %7 : vector<8x128xf32>
    %9 = arith.truncf %8 : vector<8x128xf32> to vector<8x128xbf16>
    %c0_6 = arith.constant 0 : index
    %c0_7 = arith.constant 0 : index
    %10 = vector.load %arg4[%c0_6, %c0_7] : memref<128x128xbf16, #tpu.memory_space<vmem>>, vector<128x128xbf16>
    %cst_8 = arith.constant dense<0.000000e+00> : vector<8x128xf32>
    %11 = tpu.matmul %9, %10, %cst_8 {dimension_numbers = #tpu.dot_dimension_numbers<[1], [0], [0], [1], [0, 0, 1, 1], [], []>} : vector<8x128xbf16>, vector<128x128xbf16>, vector<8x128xf32> -> vector<8x128xf32>
    %c0_9 = arith.constant 0 : index
    %c0_10 = arith.constant 0 : index
    %12 = vector.load %arg5[%c0_9, %c0_10] : memref<1x128xf32, #tpu.memory_space<vmem>>, vector<1x128xf32>
    %13 = vector.broadcast %12 : vector<1x128xf32> to vector<8x128xf32>
    %14 = arith.addf %11, %13 : vector<8x128xf32>
    %cst_11 = arith.constant 0.000000e+00 : f32
    %15 = vector.broadcast %cst_11 : f32 to vector<8x128xf32>
    %16 = arith.maximumf %14, %15 : vector<8x128xf32>
    %17 = arith.truncf %16 : vector<8x128xf32> to vector<8x128xbf16>
    %c0_12 = arith.constant 0 : index
    %c0_13 = arith.constant 0 : index
    %18 = vector.load %arg6[%c0_12, %c0_13] : memref<128x4xbf16, #tpu.memory_space<vmem>>, vector<128x4xbf16>
    %cst_14 = arith.constant dense<0.000000e+00> : vector<8x4xf32>
    %19 = tpu.matmul %17, %18, %cst_14 {dimension_numbers = #tpu.dot_dimension_numbers<[1], [0], [0], [1], [0, 0, 1, 1], [], []>} : vector<8x128xbf16>, vector<128x4xbf16>, vector<8x4xf32> -> vector<8x4xf32>
    %c0_15 = arith.constant 0 : index
    %c0_16 = arith.constant 0 : index
    %20 = vector.load %arg7[%c0_15, %c0_16] : memref<1x4xf32, #tpu.memory_space<vmem>>, vector<1x4xf32>
    %21 = vector.broadcast %20 : vector<1x4xf32> to vector<8x4xf32>
    %22 = arith.addf %19, %21 : vector<8x4xf32>
    %c0_17 = arith.constant 0 : index
    %c0_18 = arith.constant 0 : index
    %23 = vector.load %arg8[%c0_17, %c0_18] : memref<8x4xf32, #tpu.memory_space<vmem>>, vector<8x4xf32>
    tpu.vector_store %arg8[%c0_17, %c0_18], %22 {strides = array<i32>} : memref<8x4xf32, #tpu.memory_space<vmem>>, vector<8x4xf32>,
    return
  }
  func.func @transform_0(%arg0: i32) -> (i32, i32) {
    %c0_i32 = arith.constant 0 : i32
    %c0_i32_0 = arith.constant 0 : i32
    return %arg0, %c0_i32 : i32, i32
  }
  func.func @transform_1(%arg0: i32) -> (i32, i32) {
    %c0_i32 = arith.constant 0 : i32
    %c0_i32_0 = arith.constant 0 : i32
    %c0_i32_1 = arith.constant 0 : i32
    return %c0_i32, %c0_i32_0 : i32, i32
  }
  func.func @transform_2(%arg0: i32) -> (i32, i32) {
    %c0_i32 = arith.constant 0 : i32
    %c0_i32_0 = arith.constant 0 : i32
    %c0_i32_1 = arith.constant 0 : i32
    return %c0_i32, %c0_i32_0 : i32, i32
  }
  func.func @transform_3(%arg0: i32) -> (i32, i32) {
    %c0_i32 = arith.constant 0 : i32
    %c0_i32_0 = arith.constant 0 : i32
    %c0_i32_1 = arith.constant 0 : i32
    return %c0_i32, %c0_i32_0 : i32, i32
  }
  func.func @transform_4(%arg0: i32) -> (i32, i32) {
    %c0_i32 = arith.constant 0 : i32
    %c0_i32_0 = arith.constant 0 : i32
    %c0_i32_1 = arith.constant 0 : i32
    return %c0_i32, %c0_i32_0 : i32, i32
  }
  func.func @transform_5(%arg0: i32) -> (i32, i32) {
    %c0_i32 = arith.constant 0 : i32
    %c0_i32_0 = arith.constant 0 : i32
    %c0_i32_1 = arith.constant 0 : i32
    return %c0_i32, %c0_i32_0 : i32, i32
  }
  func.func @transform_6(%arg0: i32) -> (i32, i32) {
    %c0_i32 = arith.constant 0 : i32
    %c0_i32_0 = arith.constant 0 : i32
    %c0_i32_1 = arith.constant 0 : i32
    return %c0_i32, %c0_i32_0 : i32, i32
  }
  func.func @transform_7(%arg0: i32) -> (i32, i32) {
    %c0_i32 = arith.constant 0 : i32
    %c0_i32_0 = arith.constant 0 : i32
    return %arg0, %c0_i32 : i32, i32
  }
}

</mosaic_0001>

<llo_original>
// kernel: approximator_forward.1
$region0: #{approximator_forward.1}
  #allocation0 [shape = 'u32[]', space=smem, size = 0x4, offset = 0x4, fixed_abs, tag = 'smem constant byte address 0x4 - core index']
  #allocation1 [shape = 'u32[144,128]{1,0:T(1,128)}', space=vmem, size = 0x12000, scoped, tag = 'internal scratch']
  %s0 = inlined_call_operand.vmem [shape: f32[8,16], index: 0, kind: input, shape index: {}]
  %s1 = inlined_call_operand.vmem [shape: bf16[16,128], index: 1, kind: input, shape index: {}]
  %s2 = inlined_call_operand.vmem [shape: f32[1,128], index: 2, kind: input, shape index: {}]
  %s3 = inlined_call_operand.vmem [shape: bf16[128,128], index: 3, kind: input, shape index: {}]
  %s4 = inlined_call_operand.vmem [shape: f32[1,128], index: 4, kind: input, shape index: {}]
  %s5 = inlined_call_operand.vmem [shape: bf16[128,4], index: 5, kind: input, shape index: {}]
  %s6 = inlined_call_operand.vmem [shape: f32[1,4], index: 6, kind: input, shape index: {}]
  %s7 = inlined_call_operand.vmem [shape: f32[8,4], index: 7, kind: output, shape index: {}]
  %s8 = sld [smem:[#allocation0]]
  $region38: #{approximator_forward.1} parent=0
    _
  %s10 = ssub.s32 1, %s8
  %s11 = scalar_select 0, %s10, %s8
  // Predicated region
  $region2: #{approximator_forward.1} parent=0 // pred_check
    _
  $region3: #{approximator_forward.1} parent=0 // pred_check_branch
    %13 = sbr.rel (0) target = $region5
  $region4: #{approximator_forward.1} parent=0 // pred_region
    _
  $region5: #{approximator_forward.1} parent=0 // pred_fallthru
    _
  // Predicated region
  $region6: #{approximator_forward.1} parent=0 // pred_check
    _
  $region7: #{approximator_forward.1} parent=0 // pred_check_branch
    %15 = sbr.rel (0) target = $region9
  $region8: #{approximator_forward.1} parent=0 // pred_region
    _
  $region9: #{approximator_forward.1} parent=0 // pred_fallthru
    _
  // Predicated region
  $region10: #{approximator_forward.1} parent=0 // pred_check
    _
  $region11: #{approximator_forward.1} parent=0 // pred_check_branch
    %17 = sbr.rel (0) target = $region13
  $region12: #{approximator_forward.1} parent=0 // pred_region
    _
  $region13: #{approximator_forward.1} parent=0 // pred_fallthru
    _
  // Predicated region
  $region14: #{approximator_forward.1} parent=0 // pred_check
    _
  $region15: #{approximator_forward.1} parent=0 // pred_check_branch
    %19 = sbr.rel (0) target = $region17
  $region16: #{approximator_forward.1} parent=0 // pred_region
    _
  $region17: #{approximator_forward.1} parent=0 // pred_fallthru
    _
  // Predicated region
  $region18: #{approximator_forward.1} parent=0 // pred_check
    _
  $region19: #{approximator_forward.1} parent=0 // pred_check_branch
    %21 = sbr.rel (0) target = $region21
  $region20: #{approximator_forward.1} parent=0 // pred_region
    _
  $region21: #{approximator_forward.1} parent=0 // pred_fallthru
    _
  // Predicated region
  $region22: #{approximator_forward.1} parent=0 // pred_check
    _
  $region23: #{approximator_forward.1} parent=0 // pred_check_branch
    %23 = sbr.rel (0) target = $region25
  $region24: #{approximator_forward.1} parent=0 // pred_region
    _
  $region25: #{approximator_forward.1} parent=0 // pred_fallthru
    _
  // Predicated region
  $region26: #{approximator_forward.1} parent=0 // pred_check
    _
  $region27: #{approximator_forward.1} parent=0 // pred_check_branch
    %25 = sbr.rel (0) target = $region29
  $region28: #{approximator_forward.1} parent=0 // pred_region
    _
  $region29: #{approximator_forward.1} parent=0 // pred_fallthru
    _
  %v27 = vld [vmem:[%s0] sm:$0xff]
  %v28 = vpack.c.bf16 %v27, %v27
  %v29 = vld [vmem:[%s1] sm:$0xf]
  %v30 = vld [vmem:[%s1 + $0x4] sm:$0xf]
  %v31 = vld [vmem:[%s2] sm:$0x1]
  %v33 = vlaneseq
  %v34 = vshrl.u32 %v33, 7
  %v35 = vsub.s32 0, %v34
  %v36 = vrot.slane %v31, %v35
  %v40 = vunpack.c.l.b16 %v29
  %v41 = vunpack.c.l.b16 %v30
  %v42 = vpack.c.b16 %v41, %v40
  %vm44 = vcmask 130048
  %v46 = vsel %vm44, %v28, 0
  %48 = vmatprep.subr.bf16.mxu0 0
  %49 = vmatpush1.bf16.msra.mxu0 %v42
  %50 = vmatprep.subr.bf16.mxu0 0
  %51 = vmatpush1.bf16.msra.mxu0 0
  %52 = vmatprep.subr.bf16.mxu0 0
  %53 = vmatpush1.bf16.msra.mxu0 0
  %54 = vmatprep.subr.bf16.mxu0 0
  %55 = vmatpush1.bf16.msra.mxu0 0
  %56 = vmatprep.subr.bf16.mxu0 0
  %57 = vmatpush1.bf16.msra.mxu0 0
  %58 = vmatprep.subr.bf16.mxu0 0
  %59 = vmatpush1.bf16.msra.mxu0 0
  %60 = vmatprep.subr.bf16.mxu0 0
  %61 = vmatpush1.bf16.msra.mxu0 0
  %62 = vmatprep.subr.bf16.mxu0 0
  %63 = vmatpush1.bf16.msra.mxu0 0
  %64 = vmatprep.subr.bf16.mxu0 0
  %65 = vmatpush1.bf16.msra.mxu0 0
  %66 = vmatprep.subr.bf16.mxu0 0
  %67 = vmatpush1.bf16.msra.mxu0 0
  %68 = vmatprep.subr.bf16.mxu0 0
  %69 = vmatpush1.bf16.msra.mxu0 0
  %70 = vmatprep.subr.bf16.mxu0 0
  %71 = vmatpush1.bf16.msra.mxu0 0
  %72 = vmatprep.subr.bf16.mxu0 0
  %73 = vmatpush1.bf16.msra.mxu0 0
  %74 = vmatprep.subr.bf16.mxu0 0
  %75 = vmatpush1.bf16.msra.mxu0 0
  %76 = vmatprep.subr.bf16.mxu0 0
  %77 = vmatpush1.bf16.msra.mxu0 0
  %78 = vmatprep.subr.bf16.mxu0 0
  %79 = vmatpush1.bf16.msra.mxu0 0
  %80 = vmatprep.mubr.bf16.mxu0 0
  %81 = vmatmul.mubr.bf16.gmra.mrb[0].mxu0 %v46
  %v82 = vpop.f32.mrb[0].mxu0
  %v83 = vadd.f32 %v36, %v82
  %v84 = vpop.f32.mrb[0].mxu0
  %v85 = vpop.f32.mrb[0].mxu0
  %v86 = vpop.f32.mrb[0].mxu0
  %87 = vdwg.mxu0
  %v88 = vmax.f32 %v83, 0.0
  %v89 = vpack.c.bf16 %v88, %v88
  %v90 = vld [vmem:[%s3] sm:$0xf]
  %v91 = vld [vmem:[%s3 + $0x4] sm:$0xf]
  %v92 = vld [vmem:[%s3 + $0x8] sm:$0xf]
  %v93 = vld [vmem:[%s3 + $0xc] sm:$0xf]
  %v94 = vld [vmem:[%s3 + $0x10] sm:$0xf]
  %v95 = vld [vmem:[%s3 + $0x14] sm:$0xf]
  %v96 = vld [vmem:[%s3 + $0x18] sm:$0xf]
  %v97 = vld [vmem:[%s3 + $0x1c] sm:$0xf]
  %v98 = vld [vmem:[%s3 + $0x20] sm:$0xf]
  %v99 = vld [vmem:[%s3 + $0x24] sm:$0xf]
  %v100 = vld [vmem:[%s3 + $0x28] sm:$0xf]
  %v101 = vld [vmem:[%s3 + $0x2c] sm:$0xf]
  %v102 = vld [vmem:[%s3 + $0x30] sm:$0xf]
  %v103 = vld [vmem:[%s3 + $0x34] sm:$0xf]
  %v104 = vld [vmem:[%s3 + $0x38] sm:$0xf]
  %v105 = vld [vmem:[%s3 + $0x3c] sm:$0xf]
  %v106 = vld [vmem:[%s4] sm:$0x1]
  %v108 = vlaneseq
  %v109 = vshrl.u32 %v108, 7
  %v110 = vsub.s32 0, %v109
  %v111 = vrot.slane %v106, %v110
  %v129 = vunpack.c.l.b16 %v90
  %v130 = vunpack.c.l.b16 %v91
  %v131 = vunpack.c.l.b16 %v92
  %v132 = vunpack.c.l.b16 %v93
  %v133 = vunpack.c.l.b16 %v94
  %v134 = vunpack.c.l.b16 %v95
  %v135 = vunpack.c.l.b16 %v96
  %v136 = vunpack.c.l.b16 %v97
  %v137 = vunpack.c.l.b16 %v98
  %v138 = vunpack.c.l.b16 %v99
  %v139 = vunpack.c.l.b16 %v100
  %v140 = vunpack.c.l.b16 %v101
  %v141 = vunpack.c.l.b16 %v102
  %v142 = vunpack.c.l.b16 %v103
  %v143 = vunpack.c.l.b16 %v104
  %v144 = vunpack.c.l.b16 %v105
  %v145 = vpack.c.b16 %v130, %v129
  %v146 = vpack.c.b16 %v132, %v131
  %v147 = vpack.c.b16 %v134, %v133
  %v148 = vpack.c.b16 %v136, %v135
  %v149 = vpack.c.b16 %v138, %v137
  %v150 = vpack.c.b16 %v140, %v139
  %v151 = vpack.c.b16 %v142, %v141
  %v152 = vpack.c.b16 %v144, %v143
  %161 = vmatprep.subr.bf16.mxu0 0
  %162 = vmatpush1.bf16.msra.mxu0 %v145
  %163 = vmatprep.subr.bf16.mxu0 0
  %164 = vmatpush1.bf16.msra.mxu0 %v146
  %165 = vmatprep.subr.bf16.mxu0 0
  %166 = vmatpush1.bf16.msra.mxu0 %v147
  %167 = vmatprep.subr.bf16.mxu0 0
  %168 = vmatpush1.bf16.msra.mxu0 %v148
  %169 = vmatprep.subr.bf16.mxu0 0
  %170 = vmatpush1.bf16.msra.mxu0 %v149
  %171 = vmatprep.subr.bf16.mxu0 0
  %172 = vmatpush1.bf16.msra.mxu0 %v150
  %173 = vmatprep.subr.bf16.mxu0 0
  %174 = vmatpush1.bf16.msra.mxu0 %v151
  %175 = vmatprep.subr.bf16.mxu0 0
  %176 = vmatpush1.bf16.msra.mxu0 %v152
  %177 = vmatprep.subr.bf16.mxu0 0
  %178 = vmatpush1.bf16.msra.mxu0 0
  %179 = vmatprep.subr.bf16.mxu0 0
  %180 = vmatpush1.bf16.msra.mxu0 0
  %181 = vmatprep.subr.bf16.mxu0 0
  %182 = vmatpush1.bf16.msra.mxu0 0
  %183 = vmatprep.subr.bf16.mxu0 0
  %184 = vmatpush1.bf16.msra.mxu0 0
  %185 = vmatprep.subr.bf16.mxu0 0
  %186 = vmatpush1.bf16.msra.mxu0 0
  %187 = vmatprep.subr.bf16.mxu0 0
  %188 = vmatpush1.bf16.msra.mxu0 0
  %189 = vmatprep.subr.bf16.mxu0 0
  %190 = vmatpush1.bf16.msra.mxu0 0
  %191 = vmatprep.subr.bf16.mxu0 0
  %192 = vmatpush1.bf16.msra.mxu0 0
  %193 = vmatprep.mubr.bf16.mxu0 0
  %194 = vmatmul.mubr.bf16.gmra.mrb[0].mxu0 %v89
  %v195 = vpop.f32.mrb[0].mxu0
  %v196 = vadd.f32 %v111, %v195
  %v197 = vpop.f32.mrb[0].mxu0
  %v198 = vpop.f32.mrb[0].mxu0
  %v199 = vpop.f32.mrb[0].mxu0
  %200 = vdwg.mxu0
  %v201 = vmax.f32 %v196, 0.0
  %v202 = vpack.c.bf16 %v201, %v201
  %v203 = vld [vmem:[%s5] sm:$0xf]
  %v204 = vld [vmem:[%s5 + $0x4] sm:$0xf]
  %v205 = vld [vmem:[%s5 + $0x8] sm:$0xf]
  %v206 = vld [vmem:[%s5 + $0xc] sm:$0xf]
  %v207 = vld [vmem:[%s5 + $0x10] sm:$0xf]
  %v208 = vld [vmem:[%s5 + $0x14] sm:$0xf]
  %v209 = vld [vmem:[%s5 + $0x18] sm:$0xf]
  %v210 = vld [vmem:[%s5 + $0x1c] sm:$0xf]
  %v211 = vld [vmem:[%s5 + $0x20] sm:$0xf]
  %v212 = vld [vmem:[%s5 + $0x24] sm:$0xf]
  %v213 = vld [vmem:[%s5 + $0x28] sm:$0xf]
  %v214 = vld [vmem:[%s5 + $0x2c] sm:$0xf]
  %v215 = vld [vmem:[%s5 + $0x30] sm:$0xf]
  %v216 = vld [vmem:[%s5 + $0x34] sm:$0xf]
  %v217 = vld [vmem:[%s5 + $0x38] sm:$0xf]
  %v218 = vld [vmem:[%s5 + $0x3c] sm:$0xf]
  %v219 = vld [vmem:[%s6] sm:$0x1]
  %v221 = vlaneseq
  %v222 = vshrl.u32 %v221, 7
  %v223 = vsub.s32 0, %v222
  %v224 = vrot.slane %v219, %v223
  %v242 = vunpack.c.l.b16 %v203
  %v243 = vunpack.c.l.b16 %v204
  %v244 = vunpack.c.l.b16 %v205
  %v245 = vunpack.c.l.b16 %v206
  %v246 = vunpack.c.l.b16 %v207
  %v247 = vunpack.c.l.b16 %v208
  %v248 = vunpack.c.l.b16 %v209
  %v249 = vunpack.c.l.b16 %v210
  %v250 = vunpack.c.l.b16 %v211
  %v251 = vunpack.c.l.b16 %v212
  %v252 = vunpack.c.l.b16 %v213
  %v253 = vunpack.c.l.b16 %v214
  %v254 = vunpack.c.l.b16 %v215
  %v255 = vunpack.c.l.b16 %v216
  %v256 = vunpack.c.l.b16 %v217
  %v257 = vunpack.c.l.b16 %v218
  %v258 = vpack.c.b16 %v243, %v242
  %v259 = vpack.c.b16 %v245, %v244
  %v260 = vpack.c.b16 %v247, %v246
  %v261 = vpack.c.b16 %v249, %v248
  %v262 = vpack.c.b16 %v251, %v250
  %v263 = vpack.c.b16 %v253, %v252
  %v264 = vpack.c.b16 %v255, %v254
  %v265 = vpack.c.b16 %v257, %v256
  %274 = vmatprep.subr.bf16.mxu0 0
  %275 = vmatpush1.bf16.msra.mxu0 %v258
  %276 = vmatprep.subr.bf16.mxu0 0
  %277 = vmatpush1.bf16.msra.mxu0 %v259
  %278 = vmatprep.subr.bf16.mxu0 0
  %279 = vmatpush1.bf16.msra.mxu0 %v260
  %280 = vmatprep.subr.bf16.mxu0 0
  %281 = vmatpush1.bf16.msra.mxu0 %v261
  %282 = vmatprep.subr.bf16.mxu0 0
  %283 = vmatpush1.bf16.msra.mxu0 %v262
  %284 = vmatprep.subr.bf16.mxu0 0
  %285 = vmatpush1.bf16.msra.mxu0 %v263
  %286 = vmatprep.subr.bf16.mxu0 0
  %287 = vmatpush1.bf16.msra.mxu0 %v264
  %288 = vmatprep.subr.bf16.mxu0 0
  %289 = vmatpush1.bf16.msra.mxu0 %v265
  %290 = vmatprep.subr.bf16.mxu0 0
  %291 = vmatpush1.bf16.msra.mxu0 0
  %292 = vmatprep.subr.bf16.mxu0 0
  %293 = vmatpush1.bf16.msra.mxu0 0
  %294 = vmatprep.subr.bf16.mxu0 0
  %295 = vmatpush1.bf16.msra.mxu0 0
  %296 = vmatprep.subr.bf16.mxu0 0
  %297 = vmatpush1.bf16.msra.mxu0 0
  %298 = vmatprep.subr.bf16.mxu0 0
  %299 = vmatpush1.bf16.msra.mxu0 0
  %300 = vmatprep.subr.bf16.mxu0 0
  %301 = vmatpush1.bf16.msra.mxu0 0
  %302 = vmatprep.subr.bf16.mxu0 0
  %303 = vmatpush1.bf16.msra.mxu0 0
  %304 = vmatprep.subr.bf16.mxu0 0
  %305 = vmatpush1.bf16.msra.mxu0 0
  %306 = vmatprep.mubr.bf16.mxu0 0
  %307 = vmatmul.mubr.bf16.gmra.mrb[0].mxu0 %v202
  %v308 = vpop.f32.mrb[0].mxu0
  %v309 = vadd.f32 %v224, %v308
  %v310 = vpop.f32.mrb[0].mxu0
  %v311 = vpop.f32.mrb[0].mxu0
  %v312 = vpop.f32.mrb[0].mxu0
  %313 = vdwg.mxu0
  %vm314 = vcmask 31744
  %315 = vst.msk [vmem:[%s7] sm:$0xff] %vm314, %v309
  // Predicated region
  $region30: #{approximator_forward.1} parent=0 // pred_check
    _
  $region31: #{approximator_forward.1} parent=0 // pred_check_branch
    %317 = sbr.rel (0) target = $region33
  $region32: #{approximator_forward.1} parent=0 // pred_region
    _
  $region33: #{approximator_forward.1} parent=0 // pred_fallthru
    _
  // Predicated region
  $region34: #{approximator_forward.1} parent=0 // pred_check
    _
  $region35: #{approximator_forward.1} parent=0 // pred_check_branch
    %319 = sbr.rel (0) target = $region37
  $region36: #{approximator_forward.1} parent=0 // pred_region
    _
  $region37: #{approximator_forward.1} parent=0 // pred_fallthru
    _

</llo_original>
